<compile_context>
chip_gen: v7x
topology: tpu7x:2x2x1
jax: 0.10.0
libtpu: 0.0.40
codegen_flags: <defaults>
</compile_context>

<pallas_src>
import jax
import jax.numpy as jnp
from jax.experimental import pallas as pl
from jax.experimental.pallas import tpu as pltpu


def feature_embedding_kernel(packed_ref, wnum_ref, cat_tbl_ref, lbl_tbl_ref,
                             out_ref):
    # packed_ref : (TB, 3) f32  -- col0 = x_num, col1/2 = bitcast int32 ids
    # wnum_ref   : (1, D)  f32  -- transpose of torch Linear(1, D).weight
    # cat_tbl_ref: (Vc, D) f32
    # lbl_tbl_ref: (2, D)  f32
    # out_ref    : (TB, 3*D) f32 -- [num | cat | label], lane-aligned slabs.
    TB = packed_ref.shape[0]
    D = wnum_ref.shape[1]
    Vc = cat_tbl_ref.shape[0]

    x_num = packed_ref[:, 0:1]                                   # (TB, 1) f32
    ids = pltpu.bitcast(packed_ref[:, 1:3], jnp.int32)           # (TB, 2) i32
    cat_ids = ids[:, 0:1]                                        # (TB, 1)
    lbl_ids = ids[:, 1:2]                                        # (TB, 1)

    # --- numeric: Linear(1, D, bias=False) == rank-1 outer product -> VPU ---
    out_ref[:, 0:D] = x_num * wnum_ref[...]                      # (TB, D)

    # --- categorical: lookup as one-hot @ table (MXU), tiny resident vocab ---
    # precision=HIGHEST keeps the selected row bit-exact (torch gather semantics).
    # NOTE: out-of-range / negative ids yield an all-zero row (torch would raise).
    iota_c = jax.lax.broadcasted_iota(jnp.int32, (TB, Vc), 1)
    onehot_c = (iota_c == cat_ids).astype(jnp.float32)           # (TB, Vc)
    out_ref[:, D:2 * D] = jnp.dot(
        onehot_c, cat_tbl_ref[...],
        preferred_element_type=jnp.float32,
        precision=jax.lax.Precision.HIGHEST)                     # (TB, D)

    # --- label: nn.Embedding(2, D) lookup == VPU select between the 2 rows ---
    row0 = lbl_tbl_ref[0:1, :]                                   # (1, D)
    row1 = lbl_tbl_ref[1:2, :]                                   # (1, D)
    out_ref[:, 2 * D:3 * D] = jnp.where(lbl_ids > 0, row1, row0)  # (TB, D)


def _round_up(x, m):
    return (x + m - 1) // m * m


def feature_embedding(x_num, cat_ids, lbl_ids, w_num, cat_table, lbl_table,
                      *, batch_tile=1024):
    """Pallas wrapper.

    x_num:(B,) f32 | cat_ids:(B,) int | lbl_ids:(B,) int
    w_num:(1,D) f32 (transpose of torch Linear's (D,1) weight)
    cat_table:(V_cat,D) f32 | lbl_table:(2,D) f32
    returns (B, 3, D) f32 == torch.stack([num, cat, label], dim=1)
    """
    B = x_num.shape[0]
    D = w_num.shape[1]
    Vc = cat_table.shape[0]
    Vl = lbl_table.shape[0]

    # Batch tile: multiple of 8 sublanes. For non-trivial batches, guarantee at
    # least 2 grid steps so the "parallel" batch axis shards across v7x's 2 TCs.
    B8 = _round_up(B, 8)
    if B8 <= 16:
        TB = B8
    else:
        TB = min(batch_tile, _round_up((B8 + 1) // 2, 8))
    Bp = _round_up(B8, TB)

    # Pack the three per-row scalars into one (Bp, 3) f32 array (ids bitcast).
    ids_i32 = jnp.stack(
        [cat_ids.astype(jnp.int32), lbl_ids.astype(jnp.int32)], axis=1)  # (B,2)
    ids_as_f32 = jax.lax.bitcast_convert_type(ids_i32, jnp.float32)      # (B,2)
    packed = jnp.concatenate(
        [x_num.astype(jnp.float32)[:, None], ids_as_f32], axis=1)        # (B,3)
    packed = jnp.pad(packed, ((0, Bp - B), (0, 0)))                      # (Bp,3)

    # Only cast parameters when the dtype actually changes (avoid no-op copies).
    w_num = w_num if w_num.dtype == jnp.float32 else w_num.astype(jnp.float32)
    cat_table = (cat_table if cat_table.dtype == jnp.float32
                 else cat_table.astype(jnp.float32))
    lbl_table = (lbl_table if lbl_table.dtype == jnp.float32
                 else lbl_table.astype(jnp.float32))

    # Explicit VMEM budget: 2x double-buffered (input + output) blocks + the
    # resident tables + headroom (v7x: 64 MiB physical, 32 MiB default scoped).
    lane_pad = lambda d: _round_up(max(d, 1), 128)
    out_block_bytes = TB * 3 * D * 4
    in_block_bytes = TB * lane_pad(3) * 4
    table_bytes = (1 + Vc + Vl) * lane_pad(D) * 4
    vmem_bytes = 2 * (out_block_bytes + in_block_bytes) + 2 * table_bytes
    vmem_bytes = min(max(vmem_bytes + (4 << 20), 16 << 20), 64 << 20)

    out = pl.pallas_call(
        feature_embedding_kernel,
        out_shape=jax.ShapeDtypeStruct((Bp, 3 * D), jnp.float32),
        grid=(Bp // TB,),
        in_specs=[
            pl.BlockSpec((TB, 3), lambda i: (i, 0)),    # packed per-row scalars
            pl.BlockSpec((1, D), lambda i: (0, 0)),     # numeric weight (resident)
            pl.BlockSpec((Vc, D), lambda i: (0, 0)),    # cat table (resident)
            pl.BlockSpec((Vl, D), lambda i: (0, 0)),    # label table (resident)
        ],
        out_specs=pl.BlockSpec((TB, 3 * D), lambda i: (i, 0)),
        compiler_params=pltpu.CompilerParams(
            dimension_semantics=("parallel",),
            vmem_limit_bytes=vmem_bytes),
    )(packed, w_num, cat_table, lbl_table)

    # (Bp, 3*D) -> (B, 3, D): free, layout-preserving reshape; matches
    # torch.stack([num, cat, label], dim=1).
    return out[:B].reshape(B, 3, D)


def feature_embedding_ref(x_num, cat_ids, lbl_ids, w_num, cat_table, lbl_table):
    """Pure-JAX reference mirroring the PyTorch forward."""
    B = x_num.shape[0]
    num_emb = x_num.reshape(B, 1).astype(jnp.float32) @ w_num      # (B, D)
    cat_emb = cat_table[cat_ids]                                   # (B, D)
    lbl_emb = lbl_table[lbl_ids]                                   # (B, D)
    return jnp.stack([num_emb, cat_emb, lbl_emb], axis=1)


if __name__ == "__main__":
    D = 128         # embedding_dim (multiple of 128 -> lane-dense stores)
    V_CAT = 32      # categorical vocab_size
    V_LBL = 2       # label vocab_size

    key = jax.random.PRNGKey(0)
    k_w, k_cat, k_lbl, k_x, k_cid, k_lid = jax.random.split(key, 6)

    # Deterministic parameter init (normal std=1e-4, matching the module's
    # default embedding_initializer = partial(nn.init.normal_, std=1e-4)).
    w_num = jax.random.normal(k_w, (1, D), jnp.float32) * 1e-4        # Linear(1, D, bias=False)
    cat_table = jax.random.normal(k_cat, (V_CAT, D), jnp.float32) * 1e-4
    lbl_table = jax.random.normal(k_lbl, (V_LBL, D), jnp.float32) * 1e-4

    ok = True
    # B=8: tiny single-tile case; B=40: multi-step grid + batch padding.
    for B in (8, 40):
        kx, kc, kl = jax.random.split(jax.random.fold_in(k_x, B), 3)
        x_num = jax.random.normal(kx, (B,), jnp.float32)              # numeric feature
        cat_ids = jax.random.randint(kc, (B,), 0, V_CAT, jnp.int32)   # categorical feature
        lbl_ids = jax.random.randint(kl, (B,), 0, V_LBL, jnp.int32)   # label

        out = feature_embedding(x_num, cat_ids, lbl_ids,
                                w_num, cat_table, lbl_table)
        out = jax.block_until_ready(out)

        ref = feature_embedding_ref(x_num, cat_ids, lbl_ids,
                                    w_num, cat_table, lbl_table)
        ok &= out.shape == (B, 3, D)
        ok &= bool(jnp.allclose(out, ref, atol=1e-6, rtol=1e-5))

    assert ok, "mismatch vs reference"
    print("KERNEL_OK")
</pallas_src>

<mosaic_0001>
module attributes {stable_mosaic.version = 11 : i64} {
  func.func @feature_embedding_kernel(%arg0: i32, %arg1: memref<8x3xf32, #tpu.memory_space<vmem>>, %arg2: memref<1x128xf32, #tpu.memory_space<vmem>>, %arg3: memref<32x128xf32, #tpu.memory_space<vmem>>, %arg4: memref<2x128xf32, #tpu.memory_space<vmem>>, %arg5: memref<8x384xf32, #tpu.memory_space<vmem>>) attributes {dimension_semantics = [#tpu.dimension_semantics<parallel>], iteration_bounds = array<i64: 1>, scalar_prefetch = 0 : i64, scratch_operands = 0 : i64, tpu.core_type = #tpu.core_type<tc>, window_params = [{transform_indices = @transform_0, window_bounds = array<i64: 8, 3>}, {pipeline_mode = #tpu.pipeline_mode<synchronous>, transform_indices = @transform_1, window_bounds = array<i64: 1, 128>}, {pipeline_mode = #tpu.pipeline_mode<synchronous>, transform_indices = @transform_2, window_bounds = array<i64: 32, 128>}, {pipeline_mode = #tpu.pipeline_mode<synchronous>, transform_indices = @transform_3, window_bounds = array<i64: 2, 128>}, {transform_indices = @transform_4, window_bounds = array<i64: 8, 384>}]} {
    %c0 = arith.constant 0 : index
    %c0_0 = arith.constant 0 : index
    %0 = vector.load %arg1[%c0, %c0_0] : memref<8x3xf32, #tpu.memory_space<vmem>>, vector<8x1xf32>
    %c0_1 = arith.constant 0 : index
    %c1 = arith.constant 1 : index
    %1 = vector.load %arg1[%c0_1, %c1] : memref<8x3xf32, #tpu.memory_space<vmem>>, vector<8x2xf32>
    %2 = tpu.bitcast %1 : vector<8x2xf32> -> vector<8x2xi32>
    %3 = vector.extract_strided_slice %2 {offsets = [0, 0], sizes = [8, 1], strides = [1, 1]} : vector<8x2xi32> to vector<8x1xi32>
    %4 = vector.extract_strided_slice %2 {offsets = [0, 1], sizes = [8, 1], strides = [1, 1]} : vector<8x2xi32> to vector<8x1xi32>
    %c0_2 = arith.constant 0 : index
    %c0_3 = arith.constant 0 : index
    %5 = vector.load %arg2[%c0_2, %c0_3] : memref<1x128xf32, #tpu.memory_space<vmem>>, vector<1x128xf32>
    %6 = vector.broadcast %0 : vector<8x1xf32> to vector<8x128xf32>
    %7 = vector.broadcast %5 : vector<1x128xf32> to vector<8x128xf32>
    %8 = arith.mulf %6, %7 : vector<8x128xf32>
    %c0_4 = arith.constant 0 : index
    %c0_5 = arith.constant 0 : index
    %9 = vector.load %arg5[%c0_4, %c0_5] : memref<8x384xf32, #tpu.memory_space<vmem>>, vector<8x128xf32>
    tpu.vector_store %arg5[%c0_4, %c0_5], %8 {strides = array<i32>} : memref<8x384xf32, #tpu.memory_space<vmem>>, vector<8x128xf32>,
    %10 = tpu.iota {dimensions = array<i32: 1>} : vector<8x32xi32>
    %11 = vector.broadcast %3 : vector<8x1xi32> to vector<8x32xi32>
    %12 = arith.cmpi eq, %10, %11 : vector<8x32xi32>
    %13 = arith.extui %12 : vector<8x32xi1> to vector<8x32xi32>
    %14 = arith.sitofp %13 : vector<8x32xi32> to vector<8x32xf32>
    %c0_6 = arith.constant 0 : index
    %c0_7 = arith.constant 0 : index
    %15 = vector.load %arg3[%c0_6, %c0_7] : memref<32x128xf32, #tpu.memory_space<vmem>>, vector<32x128xf32>
    %cst = arith.constant dense<0.000000e+00> : vector<8x128xf32>
    %16 = tpu.matmul %14, %15, %cst {dimension_numbers = #tpu.dot_dimension_numbers<[1], [0], [0], [1], [0, 0, 1, 1], [], []>, precision = #tpu.contract_precision<fp32>} : vector<8x32xf32>, vector<32x128xf32>, vector<8x128xf32> -> vector<8x128xf32>
    %c0_8 = arith.constant 0 : index
    %c128 = arith.constant 128 : index
    %17 = vector.load %arg5[%c0_8, %c128] : memref<8x384xf32, #tpu.memory_space<vmem>>, vector<8x128xf32>
    tpu.vector_store %arg5[%c0_8, %c128], %16 {strides = array<i32>} : memref<8x384xf32, #tpu.memory_space<vmem>>, vector<8x128xf32>,
    %c0_9 = arith.constant 0 : index
    %c0_10 = arith.constant 0 : index
    %18 = vector.load %arg4[%c0_9, %c0_10] : memref<2x128xf32, #tpu.memory_space<vmem>>, vector<1x128xf32>
    %c1_11 = arith.constant 1 : index
    %c0_12 = arith.constant 0 : index
    %19 = vector.load %arg4[%c1_11, %c0_12] : memref<2x128xf32, #tpu.memory_space<vmem>>, vector<1x128xf32>
    %c0_i32 = arith.constant 0 : i32
    %20 = vector.broadcast %c0_i32 : i32 to vector<8x1xi32>
    %21 = arith.cmpi sgt, %4, %20 : vector<8x1xi32>
    %22 = vector.shape_cast %21 : vector<8x1xi1> to vector<8x1xi1>
    %23 = vector.broadcast %22 : vector<8x1xi1> to vector<8x128xi1>
    %24 = vector.shape_cast %19 : vector<1x128xf32> to vector<1x128xf32>
    %25 = vector.broadcast %24 : vector<1x128xf32> to vector<8x128xf32>
    %26 = vector.shape_cast %18 : vector<1x128xf32> to vector<1x128xf32>
    %27 = vector.broadcast %26 : vector<1x128xf32> to vector<8x128xf32>
    %28 = arith.select %23, %25, %27 : vector<8x128xi1>, vector<8x128xf32>
    %c0_13 = arith.constant 0 : index
    %c256 = arith.constant 256 : index
    %29 = vector.load %arg5[%c0_13, %c256] : memref<8x384xf32, #tpu.memory_space<vmem>>, vector<8x128xf32>
    tpu.vector_store %arg5[%c0_13, %c256], %28 {strides = array<i32>} : memref<8x384xf32, #tpu.memory_space<vmem>>, vector<8x128xf32>,
    return
  }
  func.func @transform_0(%arg0: i32) -> (i32, i32) {
    %c0_i32 = arith.constant 0 : i32
    %c0_i32_0 = arith.constant 0 : i32
    return %arg0, %c0_i32 : i32, i32
  }
  func.func @transform_1(%arg0: i32) -> (i32, i32) {
    %c0_i32 = arith.constant 0 : i32
    %c0_i32_0 = arith.constant 0 : i32
    %c0_i32_1 = arith.constant 0 : i32
    return %c0_i32, %c0_i32_0 : i32, i32
  }
  func.func @transform_2(%arg0: i32) -> (i32, i32) {
    %c0_i32 = arith.constant 0 : i32
    %c0_i32_0 = arith.constant 0 : i32
    %c0_i32_1 = arith.constant 0 : i32
    return %c0_i32, %c0_i32_0 : i32, i32
  }
  func.func @transform_3(%arg0: i32) -> (i32, i32) {
    %c0_i32 = arith.constant 0 : i32
    %c0_i32_0 = arith.constant 0 : i32
    %c0_i32_1 = arith.constant 0 : i32
    return %c0_i32, %c0_i32_0 : i32, i32
  }
  func.func @transform_4(%arg0: i32) -> (i32, i32) {
    %c0_i32 = arith.constant 0 : i32
    %c0_i32_0 = arith.constant 0 : i32
    return %arg0, %c0_i32 : i32, i32
  }
}

</mosaic_0001>

<llo_original>
// kernel: tpu_custom_call.1
$region0: #{tpu_custom_call.1}
  #allocation0 [shape = 'u32[]', space=smem, size = 0x4, offset = 0x4, fixed_abs, tag = 'smem constant byte address 0x4 - core index']
  #allocation1 [shape = 'u32[144,128]{1,0:T(1,128)}', space=vmem, size = 0x12000, scoped, tag = 'internal scratch']
  %s0 = inlined_call_operand.vmem [shape: f32[8,3], index: 0, kind: input, shape index: {}]
  %s1 = inlined_call_operand.vmem [shape: f32[1,128], index: 1, kind: input, shape index: {}]
  %s2 = inlined_call_operand.hbm [shape: f32[32,128], index: 2, kind: input, shape index: {}]
  %s3 = inlined_call_operand.vmem [shape: f32[2,128], index: 3, kind: input, shape index: {}]
  %s4 = inlined_call_operand.hbm [shape: f32[8,384], index: 4, kind: output, shape index: {}]
  %s5 = sld [smem:[#allocation0]]
  $region30: #{tpu_custom_call.1} parent=0
    _
  %s7 = ssub.s32 1, %s5
  %s8 = scalar_select 0, %s7, %s5
  $region1: #{tpu_custom_call.1} parent=0
    #allocation2 [shape = 'u8[16384]{0}', space=vmem, size = 0x4000, scoped, tag = 'input window, operand 2, single buffered']
    #allocation3 [shape = 's32[1]{0}', space=sflag, size = 0x4, scoped, tag = 'scoped memory for tpu_custom_call.1']
    #allocation4 [shape = 's32[1]{0}', space=sflag, size = 0x4, scoped, tag = 'scoped memory for tpu_custom_call.1']
    #allocation5 [shape = 'u8[12288]{0}', space=vmem, size = 0x3000, scoped, tag = 'output window, operand 0, single buffered']
    %9 = vsyncpa [#allocation3], 0
    %10 = vsyncpa [#allocation4], 0
    // Predicated region
    $region2: #{tpu_custom_call.1} parent=1 // pred_check
      _
    $region3: #{tpu_custom_call.1} parent=1 // pred_check_branch
      %12 = sbr.rel (0) target = $region5
    $region4: #{tpu_custom_call.1} parent=1 // pred_region
      _
    $region5: #{tpu_custom_call.1} parent=1 // pred_fallthru
      _
    // Predicated region
    $region6: #{tpu_custom_call.1} parent=1 // pred_check
      _
    $region7: #{tpu_custom_call.1} parent=1 // pred_check_branch
      %14 = sbr.rel (0) target = $region9
    $region8: #{tpu_custom_call.1} parent=1 // pred_region
      _
    $region9: #{tpu_custom_call.1} parent=1 // pred_fallthru
      _
    // Predicated region
    $region10: #{tpu_custom_call.1} parent=1 // pred_check
      _
    $region11: #{tpu_custom_call.1} parent=1 // pred_check_branch
      %16 = sbr.rel (0) target = $region13
    $region12: #{tpu_custom_call.1} parent=1 // pred_region
      %s18 = ssub.s32 512, 512
      %19 = vsyncadd [#allocation3], %s18
      %s20 = sshll.u32 [#allocation2], 4
      %s21 = int_to_ptr.vmem [resolvable:$true] %s20
      %26 = dma.hbm_to_vmem [thread:$0]  %s2, 512, %s21, [#allocation3], 128, 128, 8
    $region13: #{tpu_custom_call.1} parent=1 // pred_fallthru
      _
    // Predicated region
    $region14: #{tpu_custom_call.1} parent=1 // pred_check
      _
    $region15: #{tpu_custom_call.1} parent=1 // pred_check_branch
      %28 = sbr.rel (0) target = $region17
    $region16: #{tpu_custom_call.1} parent=1 // pred_region
      _
    $region17: #{tpu_custom_call.1} parent=1 // pred_fallthru
      _
    // Predicated region
    $region18: #{tpu_custom_call.1} parent=1 // pred_check
      _
    $region19: #{tpu_custom_call.1} parent=1 // pred_check_branch
      %30 = sbr.rel (0) target = $region21
    $region20: #{tpu_custom_call.1} parent=1 // pred_region
      %31 = dma.done [#allocation3], 512
    $region21: #{tpu_custom_call.1} parent=1 // pred_fallthru
      _
    %v32 = vld [vmem:[%s0] sm:$0xff]
    %v34 = vld [vmem:[%s1] sm:$0x1]
    %35 = vset.pattern.permute.xlu0 0
    %36 = vperm.xlu0 %35, %v32
    %v37 = vpop.permute.xlu0 %36
    %v40 = vlaneseq
    %v41 = vshrl.u32 %v40, 7
    %v42 = vsub.s32 0, %v41
    %v43 = vrot.slane %v34, %v42
    %v45 = vmul.f32 %v37, %v43
    %46 = vst [vmem:[#allocation5] sm:$0xff] %v45
    %v47 = vlaneseq
    %v48 = vand.u32 %v47, 127
    %49 = vset.pattern.permute.xlu0 1
    %50 = vperm.xlu0 %49, %v32
    %v51 = vpop.permute.xlu0 %50
    %vm52 = vcmp.eq.s32.totalorder %v48, %v51
    %v53 = vsel %vm52, 1, 0
    %v54 = vcvt.s32.f32 %v53
    %v55 = vld [vmem:[#allocation2] sm:$0xff]
    %v56 = vld [vmem:[#allocation2 + $0x8] sm:$0xff]
    %v57 = vld [vmem:[#allocation2 + $0x10] sm:$0xff]
    %v58 = vld [vmem:[#allocation2 + $0x18] sm:$0xff]
    %vm59 = vcmask 261120
    %v61 = vsel %vm59, %v54, 0
    %63 = vmatprep.subr.mxu0 0.0
    %v64 = vand.u32 %v55, 4294901760
    %65 = vmatpush1.msra.mxu0 %v64
    %66 = vmatprep.subr.mxu0 0.0
    %v67 = vand.u32 %v56, 4294901760
    %68 = vmatpush1.msra.mxu0 %v67
    %69 = vmatprep.subr.mxu0 0.0
    %v70 = vand.u32 %v57, 4294901760
    %71 = vmatpush1.msra.mxu0 %v70
    %72 = vmatprep.subr.mxu0 0.0
    %v73 = vand.u32 %v58, 4294901760
    %74 = vmatpush1.msra.mxu0 %v73
    %75 = vmatprep.subr.mxu0 0.0
    %76 = vmatpush1.msra.mxu0 0.0
    %77 = vmatprep.subr.mxu0 0.0
    %78 = vmatpush1.msra.mxu0 0.0
    %79 = vmatprep.subr.mxu0 0.0
    %80 = vmatpush1.msra.mxu0 0.0
    %81 = vmatprep.subr.mxu0 0.0
    %82 = vmatpush1.msra.mxu0 0.0
    %83 = vmatprep.subr.mxu0 0.0
    %84 = vmatpush1.msra.mxu0 0.0
    %85 = vmatprep.subr.mxu0 0.0
    %86 = vmatpush1.msra.mxu0 0.0
    %87 = vmatprep.subr.mxu0 0.0
    %88 = vmatpush1.msra.mxu0 0.0
    %89 = vmatprep.subr.mxu0 0.0
    %90 = vmatpush1.msra.mxu0 0.0
    %91 = vmatprep.subr.mxu0 0.0
    %92 = vmatpush1.msra.mxu0 0.0
    %93 = vmatprep.subr.mxu0 0.0
    %94 = vmatpush1.msra.mxu0 0.0
    %95 = vmatprep.subr.mxu0 0.0
    %96 = vmatpush1.msra.mxu0 0.0
    %97 = vmatprep.subr.mxu0 0.0
    %98 = vmatpush1.msra.mxu0 0.0
    %99 = vmatprep.subr.mxu0 0.0
    %100 = vmatpush1.msra.mxu0 0.0
    %101 = vmatprep.subr.mxu0 0.0
    %102 = vmatpush1.msra.mxu0 0.0
    %103 = vmatprep.subr.mxu0 0.0
    %104 = vmatpush1.msra.mxu0 0.0
    %105 = vmatprep.subr.mxu0 0.0
    %106 = vmatpush1.msra.mxu0 0.0
    %107 = vmatprep.subr.mxu0 0.0
    %108 = vmatpush1.msra.mxu0 0.0
    %109 = vmatprep.subr.mxu0 0.0
    %110 = vmatpush1.msra.mxu0 0.0
    %111 = vmatprep.subr.mxu0 0.0
    %112 = vmatpush1.msra.mxu0 0.0
    %113 = vmatprep.subr.mxu0 0.0
    %114 = vmatpush1.msra.mxu0 0.0
    %115 = vmatprep.subr.mxu0 0.0
    %116 = vmatpush1.msra.mxu0 0.0
    %117 = vmatprep.subr.mxu0 0.0
    %118 = vmatpush1.msra.mxu0 0.0
    %119 = vmatprep.subr.mxu0 0.0
    %120 = vmatpush1.msra.mxu0 0.0
    %121 = vmatprep.subr.mxu0 0.0
    %122 = vmatpush1.msra.mxu0 0.0
    %123 = vmatprep.subr.mxu0 0.0
    %124 = vmatpush1.msra.mxu0 0.0
    %125 = vmatprep.subr.mxu0 0.0
    %126 = vmatpush1.msra.mxu0 0.0
    %127 = vmatprep.subr.mxu0 0.0
    %128 = vmatpush1.msra.mxu0 0.0
    %129 = vmatprep.subr.mxu0 0.0
    %130 = vmatpush1.msra.mxu0 0.0
    %131 = vmatprep.mubr.f32.mxu0 0.0
    %v132 = vand.u32 %v61, 4294901760
    %v133 = vsub.f32 %v61, %v132
    %v134 = vand.u32 %v133, 4294901760
    %v135 = vsub.f32 %v133, %v134
    %v136 = vand.u32 %v135, 4294901760
    %137 = vmatmul.mubr.f32.gmra.mrb[0].mxu0 %v136
    %v138 = vpop.f32.mrb[0].mxu0
    %v139 = vadd.f32 0.0, %v138
    %v140 = vpop.f32.mrb[0].mxu0
    %141 = vdwg.mxu0
    %142 = vmatprep.subr.mxu0 0.0
    %v143 = vand.u32 %v55, 4294901760
    %v144 = vsub.f32 %v55, %v143
    %v145 = vand.u32 %v144, 4294901760
    %v146 = vsub.f32 %v144, %v145
    %v147 = vand.u32 %v146, 4294901760
    %148 = vmatpush1.msra.mxu0 %v147
    %149 = vmatprep.subr.mxu0 0.0
    %v150 = vand.u32 %v56, 4294901760
    %v151 = vsub.f32 %v56, %v150
    %v152 = vand.u32 %v151, 4294901760
    %v153 = vsub.f32 %v151, %v152
    %v154 = vand.u32 %v153, 4294901760
    %155 = vmatpush1.msra.mxu0 %v154
    %156 = vmatprep.subr.mxu0 0.0
    %v157 = vand.u32 %v57, 4294901760
    %v158 = vsub.f32 %v57, %v157
    %v159 = vand.u32 %v158, 4294901760
    %v160 = vsub.f32 %v158, %v159
    %v161 = vand.u32 %v160, 4294901760
    %162 = vmatpush1.msra.mxu0 %v161
    %163 = vmatprep.subr.mxu0 0.0
    %v164 = vand.u32 %v58, 4294901760
    %v165 = vsub.f32 %v58, %v164
    %v166 = vand.u32 %v165, 4294901760
    %v167 = vsub.f32 %v165, %v166
    %v168 = vand.u32 %v167, 4294901760
    %169 = vmatpush1.msra.mxu0 %v168
    %170 = vmatprep.subr.mxu0 0.0
    %171 = vmatpush1.msra.mxu0 0.0
    %172 = vmatprep.subr.mxu0 0.0
    %173 = vmatpush1.msra.mxu0 0.0
    %174 = vmatprep.subr.mxu0 0.0
    %175 = vmatpush1.msra.mxu0 0.0
    %176 = vmatprep.subr.mxu0 0.0
    %177 = vmatpush1.msra.mxu0 0.0
    %178 = vmatprep.subr.mxu0 0.0
    %179 = vmatpush1.msra.mxu0 0.0
    %180 = vmatprep.subr.mxu0 0.0
    %181 = vmatpush1.msra.mxu0 0.0
    %182 = vmatprep.subr.mxu0 0.0
    %183 = vmatpush1.msra.mxu0 0.0
    %184 = vmatprep.subr.mxu0 0.0
    %185 = vmatpush1.msra.mxu0 0.0
    %186 = vmatprep.subr.mxu0 0.0
    %187 = vmatpush1.msra.mxu0 0.0
    %188 = vmatprep.subr.mxu0 0.0
    %189 = vmatpush1.msra.mxu0 0.0
    %190 = vmatprep.subr.mxu0 0.0
    %191 = vmatpush1.msra.mxu0 0.0
    %192 = vmatprep.subr.mxu0 0.0
    %193 = vmatpush1.msra.mxu0 0.0
    %194 = vmatprep.subr.mxu0 0.0
    %195 = vmatpush1.msra.mxu0 0.0
    %196 = vmatprep.subr.mxu0 0.0
    %197 = vmatpush1.msra.mxu0 0.0
    %198 = vmatprep.subr.mxu0 0.0
    %199 = vmatpush1.msra.mxu0 0.0
    %200 = vmatprep.subr.mxu0 0.0
    %201 = vmatpush1.msra.mxu0 0.0
    %202 = vmatprep.subr.mxu0 0.0
    %203 = vmatpush1.msra.mxu0 0.0
    %204 = vmatprep.subr.mxu0 0.0
    %205 = vmatpush1.msra.mxu0 0.0
    %206 = vmatprep.subr.mxu0 0.0
    %207 = vmatpush1.msra.mxu0 0.0
    %208 = vmatprep.subr.mxu0 0.0
    %209 = vmatpush1.msra.mxu0 0.0
    %210 = vmatprep.subr.mxu0 0.0
    %211 = vmatpush1.msra.mxu0 0.0
    %212 = vmatprep.subr.mxu0 0.0
    %213 = vmatpush1.msra.mxu0 0.0
    %214 = vmatprep.subr.mxu0 0.0
    %215 = vmatpush1.msra.mxu0 0.0
    %216 = vmatprep.subr.mxu0 0.0
    %217 = vmatpush1.msra.mxu0 0.0
    %218 = vmatprep.subr.mxu0 0.0
    %219 = vmatpush1.msra.mxu0 0.0
    %220 = vmatprep.subr.mxu0 0.0
    %221 = vmatpush1.msra.mxu0 0.0
    %222 = vmatprep.subr.mxu0 0.0
    %223 = vmatpush1.msra.mxu0 0.0
    %224 = vmatprep.subr.mxu0 0.0
    %225 = vmatpush1.msra.mxu0 0.0
    %226 = vmatprep.mubr.f32.mxu0 0.0
    %v227 = vand.u32 %v61, 4294901760
    %228 = vmatmul.mubr.f32.gmra.mrb[0].mxu0 %v227
    %v229 = vpop.f32.mrb[0].mxu0
    %v230 = vadd.f32 %v139, %v229
    %v231 = vpop.f32.mrb[0].mxu0
    %232 = vdwg.mxu0
    %233 = vmatprep.subr.mxu0 0.0
    %v234 = vand.u32 %v55, 4294901760
    %v235 = vsub.f32 %v55, %v234
    %236 = vmatpush1.msra.mxu0 %v235
    %237 = vmatprep.subr.mxu0 0.0
    %v238 = vand.u32 %v56, 4294901760
    %v239 = vsub.f32 %v56, %v238
    %240 = vmatpush1.msra.mxu0 %v239
    %241 = vmatprep.subr.mxu0 0.0
    %v242 = vand.u32 %v57, 4294901760
    %v243 = vsub.f32 %v57, %v242
    %244 = vmatpush1.msra.mxu0 %v243
    %245 = vmatprep.subr.mxu0 0.0
    %v246 = vand.u32 %v58, 4294901760
    %v247 = vsub.f32 %v58, %v246
    %248 = vmatpush1.msra.mxu0 %v247
    %249 = vmatprep.subr.mxu0 0.0
    %250 = vmatpush1.msra.mxu0 0.0
    %251 = vmatprep.subr.mxu0 0.0
    %252 = vmatpush1.msra.mxu0 0.0
    %253 = vmatprep.subr.mxu0 0.0
    %254 = vmatpush1.msra.mxu0 0.0
    %255 = vmatprep.subr.mxu0 0.0
    %256 = vmatpush1.msra.mxu0 0.0
    %257 = vmatprep.subr.mxu0 0.0
    %258 = vmatpush1.msra.mxu0 0.0
    %259 = vmatprep.subr.mxu0 0.0
    %260 = vmatpush1.msra.mxu0 0.0
    %261 = vmatprep.subr.mxu0 0.0
    %262 = vmatpush1.msra.mxu0 0.0
    %263 = vmatprep.subr.mxu0 0.0
    %264 = vmatpush1.msra.mxu0 0.0
    %265 = vmatprep.subr.mxu0 0.0
    %266 = vmatpush1.msra.mxu0 0.0
    %267 = vmatprep.subr.mxu0 0.0
    %268 = vmatpush1.msra.mxu0 0.0
    %269 = vmatprep.subr.mxu0 0.0
    %270 = vmatpush1.msra.mxu0 0.0
    %271 = vmatprep.subr.mxu0 0.0
    %272 = vmatpush1.msra.mxu0 0.0
    %273 = vmatprep.subr.mxu0 0.0
    %274 = vmatpush1.msra.mxu0 0.0
    %275 = vmatprep.subr.mxu0 0.0
    %276 = vmatpush1.msra.mxu0 0.0
    %277 = vmatprep.subr.mxu0 0.0
    %278 = vmatpush1.msra.mxu0 0.0
    %279 = vmatprep.subr.mxu0 0.0
    %280 = vmatpush1.msra.mxu0 0.0
    %281 = vmatprep.subr.mxu0 0.0
    %282 = vmatpush1.msra.mxu0 0.0
    %283 = vmatprep.subr.mxu0 0.0
    %284 = vmatpush1.msra.mxu0 0.0
    %285 = vmatprep.subr.mxu0 0.0
    %286 = vmatpush1.msra.mxu0 0.0
    %287 = vmatprep.subr.mxu0 0.0
    %288 = vmatpush1.msra.mxu0 0.0
    %289 = vmatprep.subr.mxu0 0.0
    %290 = vmatpush1.msra.mxu0 0.0
    %291 = vmatprep.subr.mxu0 0.0
    %292 = vmatpush1.msra.mxu0 0.0
    %293 = vmatprep.subr.mxu0 0.0
    %294 = vmatpush1.msra.mxu0 0.0
    %295 = vmatprep.subr.mxu0 0.0
    %296 = vmatpush1.msra.mxu0 0.0
    %297 = vmatprep.subr.mxu0 0.0
    %298 = vmatpush1.msra.mxu0 0.0
    %299 = vmatprep.subr.mxu0 0.0
    %300 = vmatpush1.msra.mxu0 0.0
    %301 = vmatprep.subr.mxu0 0.0
    %302 = vmatpush1.msra.mxu0 0.0
    %303 = vmatprep.subr.mxu0 0.0
    %304 = vmatpush1.msra.mxu0 0.0
    %305 = vmatprep.mubr.f32.mxu0 0.0
    %v306 = vand.u32 %v61, 4294901760
    %v307 = vsub.f32 %v61, %v306
    %308 = vmatmul.mubr.f32.gmra.mrb[0].mxu0 %v307
    %v309 = vpop.f32.mrb[0].mxu0
    %v310 = vadd.f32 %v230, %v309
    %v311 = vpop.f32.mrb[0].mxu0
    %312 = vdwg.mxu0
    %313 = vmatprep.subr.mxu0 0.0
    %v314 = vand.u32 %v55, 4294901760
    %315 = vmatpush1.msra.mxu0 %v314
    %316 = vmatprep.subr.mxu0 0.0
    %v317 = vand.u32 %v56, 4294901760
    %318 = vmatpush1.msra.mxu0 %v317
    %319 = vmatprep.subr.mxu0 0.0
    %v320 = vand.u32 %v57, 4294901760
    %321 = vmatpush1.msra.mxu0 %v320
    %322 = vmatprep.subr.mxu0 0.0
    %v323 = vand.u32 %v58, 4294901760
    %324 = vmatpush1.msra.mxu0 %v323
    %325 = vmatprep.subr.mxu0 0.0
    %326 = vmatpush1.msra.mxu0 0.0
    %327 = vmatprep.subr.mxu0 0.0
    %328 = vmatpush1.msra.mxu0 0.0
    %329 = vmatprep.subr.mxu0 0.0
    %330 = vmatpush1.msra.mxu0 0.0
    %331 = vmatprep.subr.mxu0 0.0
    %332 = vmatpush1.msra.mxu0 0.0
    %333 = vmatprep.subr.mxu0 0.0
    %334 = vmatpush1.msra.mxu0 0.0
    %335 = vmatprep.subr.mxu0 0.0
    %336 = vmatpush1.msra.mxu0 0.0
    %337 = vmatprep.subr.mxu0 0.0
    %338 = vmatpush1.msra.mxu0 0.0
    %339 = vmatprep.subr.mxu0 0.0
    %340 = vmatpush1.msra.mxu0 0.0
    %341 = vmatprep.subr.mxu0 0.0
    %342 = vmatpush1.msra.mxu0 0.0
    %343 = vmatprep.subr.mxu0 0.0
    %344 = vmatpush1.msra.mxu0 0.0
    %345 = vmatprep.subr.mxu0 0.0
    %346 = vmatpush1.msra.mxu0 0.0
    %347 = vmatprep.subr.mxu0 0.0
    %348 = vmatpush1.msra.mxu0 0.0
    %349 = vmatprep.subr.mxu0 0.0
    %350 = vmatpush1.msra.mxu0 0.0
    %351 = vmatprep.subr.mxu0 0.0
    %352 = vmatpush1.msra.mxu0 0.0
    %353 = vmatprep.subr.mxu0 0.0
    %354 = vmatpush1.msra.mxu0 0.0
    %355 = vmatprep.subr.mxu0 0.0
    %356 = vmatpush1.msra.mxu0 0.0
    %357 = vmatprep.subr.mxu0 0.0
    %358 = vmatpush1.msra.mxu0 0.0
    %359 = vmatprep.subr.mxu0 0.0
    %360 = vmatpush1.msra.mxu0 0.0
    %361 = vmatprep.subr.mxu0 0.0
    %362 = vmatpush1.msra.mxu0 0.0
    %363 = vmatprep.subr.mxu0 0.0
    %364 = vmatpush1.msra.mxu0 0.0
    %365 = vmatprep.subr.mxu0 0.0
    %366 = vmatpush1.msra.mxu0 0.0
    %367 = vmatprep.subr.mxu0 0.0
    %368 = vmatpush1.msra.mxu0 0.0
    %369 = vmatprep.subr.mxu0 0.0
    %370 = vmatpush1.msra.mxu0 0.0
    %371 = vmatprep.subr.mxu0 0.0
    %372 = vmatpush1.msra.mxu0 0.0
    %373 = vmatprep.subr.mxu0 0.0
    %374 = vmatpush1.msra.mxu0 0.0
    %375 = vmatprep.subr.mxu0 0.0
    %376 = vmatpush1.msra.mxu0 0.0
    %377 = vmatprep.subr.mxu0 0.0
    %378 = vmatpush1.msra.mxu0 0.0
    %379 = vmatprep.subr.mxu0 0.0
    %380 = vmatpush1.msra.mxu0 0.0
    %381 = vmatprep.mubr.f32.mxu0 0.0
    %v382 = vand.u32 %v61, 4294901760
    %v383 = vsub.f32 %v61, %v382
    %v384 = vand.u32 %v383, 4294901760
    %385 = vmatmul.mubr.f32.gmra.mrb[0].mxu0 %v384
    %v386 = vpop.f32.mrb[0].mxu0
    %v387 = vadd.f32 %v310, %v386
    %v388 = vpop.f32.mrb[0].mxu0
    %389 = vdwg.mxu0
    %390 = vmatprep.subr.mxu0 0.0
    %v391 = vand.u32 %v55, 4294901760
    %v392 = vsub.f32 %v55, %v391
    %v393 = vand.u32 %v392, 4294901760
    %394 = vmatpush1.msra.mxu0 %v393
    %395 = vmatprep.subr.mxu0 0.0
    %v396 = vand.u32 %v56, 4294901760
    %v397 = vsub.f32 %v56, %v396
    %v398 = vand.u32 %v397, 4294901760
    %399 = vmatpush1.msra.mxu0 %v398
    %400 = vmatprep.subr.mxu0 0.0
    %v401 = vand.u32 %v57, 4294901760
    %v402 = vsub.f32 %v57, %v401
    %v403 = vand.u32 %v402, 4294901760
    %404 = vmatpush1.msra.mxu0 %v403
    %405 = vmatprep.subr.mxu0 0.0
    %v406 = vand.u32 %v58, 4294901760
    %v407 = vsub.f32 %v58, %v406
    %v408 = vand.u32 %v407, 4294901760
    %409 = vmatpush1.msra.mxu0 %v408
    %410 = vmatprep.subr.mxu0 0.0
    %411 = vmatpush1.msra.mxu0 0.0
    %412 = vmatprep.subr.mxu0 0.0
    %413 = vmatpush1.msra.mxu0 0.0
    %414 = vmatprep.subr.mxu0 0.0
    %415 = vmatpush1.msra.mxu0 0.0
    %416 = vmatprep.subr.mxu0 0.0
    %417 = vmatpush1.msra.mxu0 0.0
    %418 = vmatprep.subr.mxu0 0.0
    %419 = vmatpush1.msra.mxu0 0.0
    %420 = vmatprep.subr.mxu0 0.0
    %421 = vmatpush1.msra.mxu0 0.0
    %422 = vmatprep.subr.mxu0 0.0
    %423 = vmatpush1.msra.mxu0 0.0
    %424 = vmatprep.subr.mxu0 0.0
    %425 = vmatpush1.msra.mxu0 0.0
    %426 = vmatprep.subr.mxu0 0.0
    %427 = vmatpush1.msra.mxu0 0.0
    %428 = vmatprep.subr.mxu0 0.0
    %429 = vmatpush1.msra.mxu0 0.0
    %430 = vmatprep.subr.mxu0 0.0
    %431 = vmatpush1.msra.mxu0 0.0
    %432 = vmatprep.subr.mxu0 0.0
    %433 = vmatpush1.msra.mxu0 0.0
    %434 = vmatprep.subr.mxu0 0.0
    %435 = vmatpush1.msra.mxu0 0.0
    %436 = vmatprep.subr.mxu0 0.0
    %437 = vmatpush1.msra.mxu0 0.0
    %438 = vmatprep.subr.mxu0 0.0
    %439 = vmatpush1.msra.mxu0 0.0
    %440 = vmatprep.subr.mxu0 0.0
    %441 = vmatpush1.msra.mxu0 0.0
    %442 = vmatprep.subr.mxu0 0.0
    %443 = vmatpush1.msra.mxu0 0.0
    %444 = vmatprep.subr.mxu0 0.0
    %445 = vmatpush1.msra.mxu0 0.0
    %446 = vmatprep.subr.mxu0 0.0
    %447 = vmatpush1.msra.mxu0 0.0
    %448 = vmatprep.subr.mxu0 0.0
    %449 = vmatpush1.msra.mxu0 0.0
    %450 = vmatprep.subr.mxu0 0.0
    %451 = vmatpush1.msra.mxu0 0.0
    %452 = vmatprep.subr.mxu0 0.0
    %453 = vmatpush1.msra.mxu0 0.0
    %454 = vmatprep.subr.mxu0 0.0
    %455 = vmatpush1.msra.mxu0 0.0
    %456 = vmatprep.subr.mxu0 0.0
    %457 = vmatpush1.msra.mxu0 0.0
    %458 = vmatprep.subr.mxu0 0.0
    %459 = vmatpush1.msra.mxu0 0.0
    %460 = vmatprep.subr.mxu0 0.0
    %461 = vmatpush1.msra.mxu0 0.0
    %462 = vmatprep.subr.mxu0 0.0
    %463 = vmatpush1.msra.mxu0 0.0
    %464 = vmatprep.subr.mxu0 0.0
    %465 = vmatpush1.msra.mxu0 0.0
    %466 = vmatprep.mubr.f32.mxu0 0.0
    %v467 = vand.u32 %v61, 4294901760
    %468 = vmatmul.mubr.f32.gmra.mrb[0].mxu0 %v467
    %v469 = vpop.f32.mrb[0].mxu0
    %v470 = vadd.f32 %v387, %v469
    %v471 = vpop.f32.mrb[0].mxu0
    %472 = vdwg.mxu0
    %473 = vmatprep.subr.mxu0 0.0
    %v474 = vand.u32 %v55, 4294901760
    %475 = vmatpush1.msra.mxu0 %v474
    %476 = vmatprep.subr.mxu0 0.0
    %v477 = vand.u32 %v56, 4294901760
    %478 = vmatpush1.msra.mxu0 %v477
    %479 = vmatprep.subr.mxu0 0.0
    %v480 = vand.u32 %v57, 4294901760
    %481 = vmatpush1.msra.mxu0 %v480
    %482 = vmatprep.subr.mxu0 0.0
    %v483 = vand.u32 %v58, 4294901760
    %484 = vmatpush1.msra.mxu0 %v483
    %485 = vmatprep.subr.mxu0 0.0
    %486 = vmatpush1.msra.mxu0 0.0
    %487 = vmatprep.subr.mxu0 0.0
    %488 = vmatpush1.msra.mxu0 0.0
    %489 = vmatprep.subr.mxu0 0.0
    %490 = vmatpush1.msra.mxu0 0.0
    %491 = vmatprep.subr.mxu0 0.0
    %492 = vmatpush1.msra.mxu0 0.0
    %493 = vmatprep.subr.mxu0 0.0
    %494 = vmatpush1.msra.mxu0 0.0
    %495 = vmatprep.subr.mxu0 0.0
    %496 = vmatpush1.msra.mxu0 0.0
    %497 = vmatprep.subr.mxu0 0.0
    %498 = vmatpush1.msra.mxu0 0.0
    %499 = vmatprep.subr.mxu0 0.0
    %500 = vmatpush1.msra.mxu0 0.0
    %501 = vmatprep.subr.mxu0 0.0
    %502 = vmatpush1.msra.mxu0 0.0
    %503 = vmatprep.subr.mxu0 0.0
    %504 = vmatpush1.msra.mxu0 0.0
    %505 = vmatprep.subr.mxu0 0.0
    %506 = vmatpush1.msra.mxu0 0.0
    %507 = vmatprep.subr.mxu0 0.0
    %508 = vmatpush1.msra.mxu0 0.0
    %509 = vmatprep.subr.mxu0 0.0
    %510 = vmatpush1.msra.mxu0 0.0
    %511 = vmatprep.subr.mxu0 0.0
    %512 = vmatpush1.msra.mxu0 0.0
    %513 = vmatprep.subr.mxu0 0.0
    %514 = vmatpush1.msra.mxu0 0.0
    %515 = vmatprep.subr.mxu0 0.0
    %516 = vmatpush1.msra.mxu0 0.0
    %517 = vmatprep.subr.mxu0 0.0
    %518 = vmatpush1.msra.mxu0 0.0
    %519 = vmatprep.subr.mxu0 0.0
    %520 = vmatpush1.msra.mxu0 0.0
    %521 = vmatprep.subr.mxu0 0.0
    %522 = vmatpush1.msra.mxu0 0.0
    %523 = vmatprep.subr.mxu0 0.0
    %524 = vmatpush1.msra.mxu0 0.0
    %525 = vmatprep.subr.mxu0 0.0
    %526 = vmatpush1.msra.mxu0 0.0
    %527 = vmatprep.subr.mxu0 0.0
    %528 = vmatpush1.msra.mxu0 0.0
    %529 = vmatprep.subr.mxu0 0.0
    %530 = vmatpush1.msra.mxu0 0.0
    %531 = vmatprep.subr.mxu0 0.0
    %532 = vmatpush1.msra.mxu0 0.0
    %533 = vmatprep.subr.mxu0 0.0
    %534 = vmatpush1.msra.mxu0 0.0
    %535 = vmatprep.subr.mxu0 0.0
    %536 = vmatpush1.msra.mxu0 0.0
    %537 = vmatprep.subr.mxu0 0.0
    %538 = vmatpush1.msra.mxu0 0.0
    %539 = vmatprep.subr.mxu0 0.0
    %540 = vmatpush1.msra.mxu0 0.0
    %541 = vmatprep.mubr.f32.mxu0 0.0
    %v542 = vand.u32 %v61, 4294901760
    %543 = vmatmul.mubr.f32.gmra.mrb[0].mxu0 %v542
    %v544 = vpop.f32.mrb[0].mxu0
    %v545 = vadd.f32 %v470, %v544
    %v546 = vpop.f32.mrb[0].mxu0
    %547 = vdwg.mxu0
    %548 = vst [vmem:[#allocation5 + $0x8] sm:$0xff] %v545
    %v549 = vld [vmem:[%s3] sm:$0x1]
    %v550 = vld [vmem:[%s3 + $0x1] sm:$0x1]
    %vm551 = vcmp.gt.s32.totalorder %v32, 0
    %v552 = vsel %vm551, 1, 0
    %553 = vset.pattern.permute.xlu0 2
    %554 = vperm.xlu0 %553, %v552
    %v555 = vpop.permute.xlu0 %554
    %vm556 = vcmp.eq.s32.totalorder %v555, 1
    %v557 = vlaneseq
    %v558 = vshrl.u32 %v557, 7
    %v559 = vsub.s32 0, %v558
    %v560 = vrot.slane %v550, %v559
    %v561 = vlaneseq
    %v562 = vshrl.u32 %v561, 7
    %v563 = vsub.s32 0, %v562
    %v564 = vrot.slane %v549, %v563
    %v565 = vsel %vm556, %v560, %v564
    %566 = vst [vmem:[#allocation5 + $0x10] sm:$0xff] %v565
    // Predicated region
    $region22: #{tpu_custom_call.1} parent=1 // pred_check
      _
    $region23: #{tpu_custom_call.1} parent=1 // pred_check_branch
      %568 = sbr.rel (0) target = $region25
    $region24: #{tpu_custom_call.1} parent=1 // pred_region
      %s570 = ssub.s32 384, 384
      %571 = vsyncadd [#allocation4], %s570
      %s573 = sshll.u32 [#allocation5], 4
      %s574 = int_to_ptr.vmem [resolvable:$true] %s573
      %576 = dma.vmem_to_hbm [thread:$0]  %s574, 384, %s4, [#allocation4]
    $region25: #{tpu_custom_call.1} parent=1 // pred_fallthru
      _
    // Predicated region
    $region26: #{tpu_custom_call.1} parent=1 // pred_check
      _
    $region27: #{tpu_custom_call.1} parent=1 // pred_check_branch
      %578 = sbr.rel (0) target = $region29
    $region28: #{tpu_custom_call.1} parent=1 // pred_region
      %579 = dma.done [#allocation4], 384
    $region29: #{tpu_custom_call.1} parent=1 // pred_fallthru
      _
    %580 = vsyncpa [#allocation3], 1
    %581 = vsyncpa [#allocation4], 1

</llo_original>
